<compile_context>
chip_gen: v7x
topology: tpu7x:2x2x1
jax: 0.10.0
libtpu: 0.0.40
codegen_flags: <defaults>
</compile_context>

<pallas_src>
import functools

import jax
import jax.numpy as jnp
from jax.experimental import pallas as pl
from jax.experimental.pallas import tpu as pltpu

ACTION_SIZE = 4
RAY_BLOCKS = 7
RAY_BLOCK_SIZE = 5
VELOCITY_SIZE = 2
STATE_SIZE = RAY_BLOCKS * RAY_BLOCK_SIZE + VELOCITY_SIZE      # 37
FC1_UNITS = 64
FC2_UNITS = 64

RAY_IN = RAY_BLOCKS * RAY_BLOCK_SIZE                           # 35
RAY_FEATURES = RAY_BLOCKS * FC1_UNITS                          # 448
REDUCED_SIZE = RAY_FEATURES + VELOCITY_SIZE                    # 450
REDUCED_PAD = 512                                              # 4 * 128 (lane aligned)
FUSED_HIDDEN = 2 * FC2_UNITS                                   # 128 (adv | val)
SLAB_SIZE = 8                                                  # [adv(4) | val(1) | pad(3)]

# Per-step footprint at TB=4096: x ~0.6MiB (x2 buffers) + packed weights ~0.35MiB
# + q out 64KiB + slab scratch B*32B  -> comfortably inside default scoped VMEM
# on v5e (16MiB), v6e (32MiB) and v7x (32MiB scoped / 64MiB physical).
DEFAULT_TILE_B = 4096


# ---------------------------------------------------------------------------
# Single fused kernel: phase 0 = branches + adv-sum, phase 1 = centering.
# ---------------------------------------------------------------------------
def _make_fused_kernel(batch_size, tile_rows):
    inv_denom = 1.0 / float(batch_size * ACTION_SIZE)

    def kernel(x_ref, wpre_ref, bpre_ref, vmask_ref, w2_ref, b2_ref,
               w3_ref, b3_ref, q_ref, slab_ref, asum_ref):
        phase = pl.program_id(0)
        tile = pl.program_id(1)

        @pl.when(jnp.logical_and(phase == 0, tile == 0))
        def _init():
            asum_ref[...] = jnp.zeros_like(asum_ref)

        @pl.when(phase == 0)
        def _branches():
            x = x_ref[...]                                                 # (TB, 37)

            # Fused "ray layer": block-diag fc1 for 7 ray blocks + velocity identity.
            h = jnp.dot(x, wpre_ref[...],
                        preferred_element_type=jnp.float32) + bpre_ref[...]
            # ReLU ray features, pass velocity through, keep padding at zero:
            #   mask = 1 on velocity cols, 0 elsewhere -> max(h, h*mask).
            reduced = jnp.maximum(h, h * vmask_ref[...])                   # (TB, 512)

            # Fused adv_fc2 | v_fc2 (one 512x128 matmul) + ReLU.
            h2 = jnp.dot(reduced, w2_ref[...],
                         preferred_element_type=jnp.float32) + b2_ref[...]
            h2 = jnp.maximum(h2, 0.0)                                      # (TB, 128)

            # Fused block-diag adv_fc3 | v_fc3 -> slab [adv(4) | val(1) | 0 pad].
            slab = jnp.dot(h2, w3_ref[...],
                           preferred_element_type=jnp.float32) + b3_ref[...]
            slab_ref[tile] = slab                                          # VMEM only

            # Global adv sum: mask out-of-bounds rows of a partial last tile so
            # garbage rows never poison the mean.
            adv = slab[:, :ACTION_SIZE]                                    # (TB, 4)
            rows = (tile * tile_rows
                    + jax.lax.broadcasted_iota(jnp.int32, adv.shape, 0))
            part = jnp.sum(jnp.where(rows < batch_size, adv, 0.0))
            asum_ref[...] = asum_ref[...] + part

        @pl.when(phase == 1)
        def _center():
            slab = slab_ref[tile]                                          # (TB, 8)
            adv = slab[:, :ACTION_SIZE]
            val = slab[:, ACTION_SIZE:ACTION_SIZE + 1]
            mean = asum_ref[...] * inv_denom                               # (1, 1)
            q_ref[...] = adv + val - mean

    return kernel


def dueling_q_forward(state, packed, *, tile_b=DEFAULT_TILE_B):
    """state: (B, 37) float32 -> (B, 4) float32 Q-values. One Pallas launch."""
    B = state.shape[0]
    TB = B if B <= tile_b else tile_b      # full-extent block for small B
    nt = pl.cdiv(B, TB)

    cost = pl.CostEstimate(
        flops=2 * B * (STATE_SIZE * REDUCED_PAD
                       + REDUCED_PAD * FUSED_HIDDEN
                       + FUSED_HIDDEN * SLAB_SIZE),
        transcendentals=0,
        bytes_accessed=4 * (B * (STATE_SIZE + ACTION_SIZE)
                            + STATE_SIZE * REDUCED_PAD + 2 * REDUCED_PAD
                            + REDUCED_PAD * FUSED_HIDDEN + FUSED_HIDDEN
                            + FUSED_HIDDEN * SLAB_SIZE + SLAB_SIZE),
    )

    kernel = _make_fused_kernel(B, TB)

    return pl.pallas_call(
        kernel,
        out_shape=jax.ShapeDtypeStruct((B, ACTION_SIZE), jnp.float32),
        grid=(2, nt),                      # (phase, batch-tile); phase outermost
        in_specs=[
            # x: tiled in phase 0, pinned to block 0 in phase 1 (no re-DMA).
            pl.BlockSpec((TB, STATE_SIZE), lambda p, i: (i * (1 - p), 0)),
            # Packed weights: grid-invariant -> VMEM resident across all steps.
            pl.BlockSpec((STATE_SIZE, REDUCED_PAD), lambda p, i: (0, 0)),
            pl.BlockSpec((1, REDUCED_PAD), lambda p, i: (0, 0)),
            pl.BlockSpec((1, REDUCED_PAD), lambda p, i: (0, 0)),           # velocity mask
            pl.BlockSpec((REDUCED_PAD, FUSED_HIDDEN), lambda p, i: (0, 0)),
            pl.BlockSpec((1, FUSED_HIDDEN), lambda p, i: (0, 0)),
            pl.BlockSpec((FUSED_HIDDEN, SLAB_SIZE), lambda p, i: (0, 0)),
            pl.BlockSpec((1, SLAB_SIZE), lambda p, i: (0, 0)),
        ],
        # q: pinned to block 0 during phase 0 (never written), real blocks in phase 1.
        out_specs=pl.BlockSpec((TB, ACTION_SIZE), lambda p, i: (i * p, 0)),
        scratch_shapes=[
            pltpu.VMEM((nt, TB, SLAB_SIZE), jnp.float32),  # per-tile slab (VMEM only)
            pltpu.VMEM((1, 1), jnp.float32),               # global adv sum accumulator
        ],
        compiler_params=pltpu.CompilerParams(
            # Phase axis imposes a global ordering -> "arbitrary" (accepted per
            # perf review: kernel is launch-overhead bound, not compute bound).
            dimension_semantics=("arbitrary", "arbitrary")),
        cost_estimate=cost,
    )(state, packed["wpre"], packed["bpre"], packed["vmask"],
      packed["w2"], packed["b2"], packed["w3"], packed["b3"])


# ---------------------------------------------------------------------------
# Parameter init (PyTorch nn.Linear default init, weights stored (in, out))
# and packing into the fused layout.
# ---------------------------------------------------------------------------
def init_params(key):
    def linear(k, fan_in, fan_out):
        kw, kb = jax.random.split(k)
        bound = 1.0 / (fan_in ** 0.5)
        w = jax.random.uniform(kw, (fan_in, fan_out), jnp.float32, -bound, bound)
        b = jax.random.uniform(kb, (1, fan_out), jnp.float32, -bound, bound)
        return w, b

    ks = jax.random.split(key, 5)
    fc1_w, fc1_b = linear(ks[0], RAY_BLOCK_SIZE, FC1_UNITS)
    adv_w2, adv_b2 = linear(ks[1], REDUCED_SIZE, FC2_UNITS)
    adv_w3, adv_b3 = linear(ks[2], FC2_UNITS, ACTION_SIZE)
    v_w2, v_b2 = linear(ks[3], REDUCED_SIZE, FC2_UNITS)
    v_w3, v_b3 = linear(ks[4], FC2_UNITS, 1)
    return dict(fc1_w=fc1_w, fc1_b=fc1_b,
                adv_w2=adv_w2, adv_b2=adv_b2, adv_w3=adv_w3, adv_b3=adv_b3,
                v_w2=v_w2, v_b2=v_b2, v_w3=v_w3, v_b3=v_b3)


def pack_params(p):
    # W_pre: block-diag of 7 copies of fc1 (5->64) + identity for velocity.
    wpre = jnp.zeros((STATE_SIZE, REDUCED_PAD), jnp.float32)
    bpre = jnp.zeros((1, REDUCED_PAD), jnp.float32)
    for b in range(RAY_BLOCKS):
        r0, c0 = b * RAY_BLOCK_SIZE, b * FC1_UNITS
        wpre = wpre.at[r0:r0 + RAY_BLOCK_SIZE, c0:c0 + FC1_UNITS].set(p["fc1_w"])
        bpre = bpre.at[0, c0:c0 + FC1_UNITS].set(p["fc1_b"][0])
    wpre = wpre.at[RAY_IN, RAY_FEATURES].set(1.0)
    wpre = wpre.at[RAY_IN + 1, RAY_FEATURES + 1].set(1.0)

    # Velocity pass-through mask (1 on velocity columns, 0 elsewhere):
    # reduced = max(h, h * vmask) -> ReLU on ray cols, identity on velocity.
    vmask = jnp.zeros((1, REDUCED_PAD), jnp.float32)
    vmask = vmask.at[0, RAY_FEATURES].set(1.0)
    vmask = vmask.at[0, RAY_FEATURES + 1].set(1.0)

    # W2: adv_fc2 | v_fc2 side by side (padding rows are zero).
    w2 = jnp.zeros((REDUCED_PAD, FUSED_HIDDEN), jnp.float32)
    w2 = w2.at[:REDUCED_SIZE, :FC2_UNITS].set(p["adv_w2"])
    w2 = w2.at[:REDUCED_SIZE, FC2_UNITS:].set(p["v_w2"])
    b2 = jnp.concatenate([p["adv_b2"], p["v_b2"]], axis=1)

    # W3: block-diag adv_fc3 (64->4) and v_fc3 (64->1), output padded to 8.
    w3 = jnp.zeros((FUSED_HIDDEN, SLAB_SIZE), jnp.float32)
    w3 = w3.at[:FC2_UNITS, :ACTION_SIZE].set(p["adv_w3"])
    w3 = w3.at[FC2_UNITS:, ACTION_SIZE:ACTION_SIZE + 1].set(p["v_w3"])
    b3 = jnp.zeros((1, SLAB_SIZE), jnp.float32)
    b3 = b3.at[0, :ACTION_SIZE].set(p["adv_b3"][0])
    b3 = b3.at[0, ACTION_SIZE].set(p["v_b3"][0, 0])

    return dict(wpre=wpre, bpre=bpre, vmask=vmask, w2=w2, b2=b2, w3=w3, b3=b3)


# ---------------------------------------------------------------------------
# Pure-JAX reference (literal translation of the PyTorch forward)
# ---------------------------------------------------------------------------
def reference_forward(state, p):
    chunks = [state[:, b * RAY_BLOCK_SIZE:(b + 1) * RAY_BLOCK_SIZE]
              for b in range(RAY_BLOCKS)]
    vel = state[:, RAY_IN:]
    transformed = [jax.nn.relu(c @ p["fc1_w"] + p["fc1_b"]) for c in chunks]
    reduced = jnp.concatenate(transformed + [vel], axis=1)              # (B, 450)
    adv = jax.nn.relu(reduced @ p["adv_w2"] + p["adv_b2"]) @ p["adv_w3"] + p["adv_b3"]
    val = jax.nn.relu(reduced @ p["v_w2"] + p["v_b2"]) @ p["v_w3"] + p["v_b3"]
    return val + adv - jnp.mean(adv)


if __name__ == "__main__":
    key = jax.random.PRNGKey(0)
    kp, kx1, kx2 = jax.random.split(key, 3)

    params = init_params(kp)
    packed = pack_params(params)

    # Small test: single full-extent tile, both grid phases.
    fwd = jax.jit(dueling_q_forward)
    state_small = jax.random.normal(kx1, (2, STATE_SIZE), dtype=jnp.float32)
    q_small = jax.block_until_ready(fwd(state_small, packed))
    ref_small = reference_forward(state_small, params)
    assert q_small.shape == (2, ACTION_SIZE)
    assert jnp.allclose(q_small, ref_small, atol=2e-3, rtol=2e-3), (q_small, ref_small)

    # Multi-tile test with a PARTIAL last tile (200 rows, tile=64 -> 4 tiles,
    # last tile has only 8 valid rows) to exercise the masked global-mean path.
    fwd_tiled = jax.jit(functools.partial(dueling_q_forward, tile_b=64))
    state_big = jax.random.normal(kx2, (200, STATE_SIZE), dtype=jnp.float32)
    q_big = jax.block_until_ready(fwd_tiled(state_big, packed))
    ref_big = reference_forward(state_big, params)
    assert q_big.shape == (200, ACTION_SIZE)
    assert jnp.allclose(q_big, ref_big, atol=2e-3, rtol=2e-3)

    print("KERNEL_OK")
</pallas_src>

<mosaic_0001>
module attributes {stable_mosaic.version = 11 : i64} {
  func.func @kernel(%arg0: i32, %arg1: i32, %arg2: memref<2x37xf32, #tpu.memory_space<vmem>>, %arg3: memref<37x512xf32, #tpu.memory_space<vmem>>, %arg4: memref<1x512xf32, #tpu.memory_space<vmem>>, %arg5: memref<1x512xf32, #tpu.memory_space<vmem>>, %arg6: memref<512x128xf32, #tpu.memory_space<vmem>>, %arg7: memref<1x128xf32, #tpu.memory_space<vmem>>, %arg8: memref<128x8xf32, #tpu.memory_space<vmem>>, %arg9: memref<1x8xf32, #tpu.memory_space<vmem>>, %arg10: memref<2x4xf32, #tpu.memory_space<vmem>>, %arg11: memref<1x2x8xf32, #tpu.memory_space<vmem>>, %arg12: memref<1x1xf32, #tpu.memory_space<vmem>>) attributes {dimension_semantics = [#tpu.dimension_semantics<arbitrary>, #tpu.dimension_semantics<arbitrary>], iteration_bounds = array<i64: 2, 1>, scalar_prefetch = 0 : i64, scratch_operands = 2 : i64, tpu.core_type = #tpu.core_type<tc>, window_params = [{transform_indices = @transform_0, window_bounds = array<i64: 2, 37>}, {pipeline_mode = #tpu.pipeline_mode<synchronous>, transform_indices = @transform_1, window_bounds = array<i64: 37, 512>}, {pipeline_mode = #tpu.pipeline_mode<synchronous>, transform_indices = @transform_2, window_bounds = array<i64: 1, 512>}, {pipeline_mode = #tpu.pipeline_mode<synchronous>, transform_indices = @transform_3, window_bounds = array<i64: 1, 512>}, {pipeline_mode = #tpu.pipeline_mode<synchronous>, transform_indices = @transform_4, window_bounds = array<i64: 512, 128>}, {pipeline_mode = #tpu.pipeline_mode<synchronous>, transform_indices = @transform_5, window_bounds = array<i64: 1, 128>}, {pipeline_mode = #tpu.pipeline_mode<synchronous>, transform_indices = @transform_6, window_bounds = array<i64: 128, 8>}, {pipeline_mode = #tpu.pipeline_mode<synchronous>, transform_indices = @transform_7, window_bounds = array<i64: 1, 8>}, {transform_indices = @transform_8, window_bounds = array<i64: 2, 4>}]} {
    %c0_i32 = arith.constant 0 : i32
    %0 = arith.cmpi eq, %arg0, %c0_i32 : i32
    %c0_i32_0 = arith.constant 0 : i32
    %1 = arith.cmpi eq, %arg1, %c0_i32_0 : i32
    %2 = arith.andi %0, %1 : i1
    %3 = arith.extui %2 : i1 to i32
    %c0_i32_1 = arith.constant 0 : i32
    %4 = arith.cmpi ne, %3, %c0_i32_1 : i32
    scf.if %4 {
      %cst = arith.constant 0.000000e+00 : f32
      %11 = vector.broadcast %cst : f32 to vector<1x1xf32>
      %c0 = arith.constant 0 : index
      %c0_5 = arith.constant 0 : index
      %12 = vector.load %arg12[%c0, %c0_5] : memref<1x1xf32, #tpu.memory_space<vmem>>, vector<1x1xf32>
      tpu.vector_store %arg12[%c0, %c0_5], %11 {strides = array<i32>} : memref<1x1xf32, #tpu.memory_space<vmem>>, vector<1x1xf32>,
    } else {
    }
    %c0_i32_2 = arith.constant 0 : i32
    %5 = arith.cmpi eq, %arg0, %c0_i32_2 : i32
    %6 = arith.extui %5 : i1 to i32
    %c0_i32_3 = arith.constant 0 : i32
    %7 = arith.cmpi ne, %6, %c0_i32_3 : i32
    scf.if %7 {
      %c0 = arith.constant 0 : index
      %c0_5 = arith.constant 0 : index
      %11 = vector.load %arg2[%c0, %c0_5] : memref<2x37xf32, #tpu.memory_space<vmem>>, vector<2x37xf32>
      %c0_6 = arith.constant 0 : index
      %c0_7 = arith.constant 0 : index
      %12 = vector.load %arg3[%c0_6, %c0_7] : memref<37x512xf32, #tpu.memory_space<vmem>>, vector<37x512xf32>
      %cst = arith.constant dense<0.000000e+00> : vector<2x512xf32>
      %13 = tpu.matmul %11, %12, %cst {dimension_numbers = #tpu.dot_dimension_numbers<[1], [0], [0], [1], [0, 0, 1, 1], [], []>} : vector<2x37xf32>, vector<37x512xf32>, vector<2x512xf32> -> vector<2x512xf32>
      %c0_8 = arith.constant 0 : index
      %c0_9 = arith.constant 0 : index
      %14 = vector.load %arg4[%c0_8, %c0_9] : memref<1x512xf32, #tpu.memory_space<vmem>>, vector<1x512xf32>
      %15 = vector.broadcast %14 : vector<1x512xf32> to vector<2x512xf32>
      %16 = arith.addf %13, %15 : vector<2x512xf32>
      %c0_10 = arith.constant 0 : index
      %c0_11 = arith.constant 0 : index
      %17 = vector.load %arg5[%c0_10, %c0_11] : memref<1x512xf32, #tpu.memory_space<vmem>>, vector<1x512xf32>
      %18 = vector.broadcast %17 : vector<1x512xf32> to vector<2x512xf32>
      %19 = arith.mulf %16, %18 : vector<2x512xf32>
      %20 = arith.maximumf %16, %19 : vector<2x512xf32>
      %c0_12 = arith.constant 0 : index
      %c0_13 = arith.constant 0 : index
      %21 = vector.load %arg6[%c0_12, %c0_13] : memref<512x128xf32, #tpu.memory_space<vmem>>, vector<512x128xf32>
      %cst_14 = arith.constant dense<0.000000e+00> : vector<2x128xf32>
      %22 = tpu.matmul %20, %21, %cst_14 {dimension_numbers = #tpu.dot_dimension_numbers<[1], [0], [0], [1], [0, 0, 1, 1], [], []>} : vector<2x512xf32>, vector<512x128xf32>, vector<2x128xf32> -> vector<2x128xf32>
      %c0_15 = arith.constant 0 : index
      %c0_16 = arith.constant 0 : index
      %23 = vector.load %arg7[%c0_15, %c0_16] : memref<1x128xf32, #tpu.memory_space<vmem>>, vector<1x128xf32>
      %24 = vector.broadcast %23 : vector<1x128xf32> to vector<2x128xf32>
      %25 = arith.addf %22, %24 : vector<2x128xf32>
      %cst_17 = arith.constant 0.000000e+00 : f32
      %26 = vector.broadcast %cst_17 : f32 to vector<2x128xf32>
      %27 = arith.maximumf %25, %26 : vector<2x128xf32>
      %c0_18 = arith.constant 0 : index
      %c0_19 = arith.constant 0 : index
      %28 = vector.load %arg8[%c0_18, %c0_19] : memref<128x8xf32, #tpu.memory_space<vmem>>, vector<128x8xf32>
      %cst_20 = arith.constant dense<0.000000e+00> : vector<2x8xf32>
      %29 = tpu.matmul %27, %28, %cst_20 {dimension_numbers = #tpu.dot_dimension_numbers<[1], [0], [0], [1], [0, 0, 1, 1], [], []>} : vector<2x128xf32>, vector<128x8xf32>, vector<2x8xf32> -> vector<2x8xf32>
      %c0_21 = arith.constant 0 : index
      %c0_22 = arith.constant 0 : index
      %30 = vector.load %arg9[%c0_21, %c0_22] : memref<1x8xf32, #tpu.memory_space<vmem>>, vector<1x8xf32>
      %31 = vector.broadcast %30 : vector<1x8xf32> to vector<2x8xf32>
      %32 = arith.addf %29, %31 : vector<2x8xf32>
      %33 = arith.index_cast %arg1 : i32 to index
      %c0_23 = arith.constant 0 : index
      %c0_24 = arith.constant 0 : index
      %34 = vector.load %arg11[%33, %c0_23, %c0_24] : memref<1x2x8xf32, #tpu.memory_space<vmem>>, vector<1x2x8xf32>
      %35 = vector.shape_cast %34 : vector<1x2x8xf32> to vector<2x8xf32>
      %36 = vector.shape_cast %32 : vector<2x8xf32> to vector<1x2x8xf32>
      tpu.vector_store %arg11[%33, %c0_23, %c0_24], %36 {strides = array<i32>} : memref<1x2x8xf32, #tpu.memory_space<vmem>>, vector<1x2x8xf32>,
      %37 = vector.extract_strided_slice %32 {offsets = [0, 0], sizes = [2, 4], strides = [1, 1]} : vector<2x8xf32> to vector<2x4xf32>
      %c2_i32 = arith.constant 2 : i32
      %38 = arith.muli %arg1, %c2_i32 : i32
      %39 = tpu.iota {dimensions = array<i32: 0>} : vector<2x4xi32>
      %40 = vector.broadcast %38 : i32 to vector<2x4xi32>
      %41 = arith.addi %40, %39 : vector<2x4xi32>
      %c2_i32_25 = arith.constant 2 : i32
      %42 = vector.broadcast %c2_i32_25 : i32 to vector<2x4xi32>
      %43 = arith.cmpi slt, %41, %42 : vector<2x4xi32>
      %cst_26 = arith.constant 0.000000e+00 : f32
      %44 = vector.broadcast %cst_26 : f32 to vector<2x4xf32>
      %45 = arith.select %43, %37, %44 : vector<2x4xi1>, vector<2x4xf32>
      %46 = vector.shape_cast %45 : vector<2x4xf32> to vector<1x2x4xf32>
      %cst_27 = arith.constant dense<0.000000e+00> : vector<1xf32>
      %47 = vector.multi_reduction <add>, %46, %cst_27 [1, 2] : vector<1x2x4xf32> to vector<1xf32>
      %48 = vector.shape_cast %47 : vector<1xf32> to vector<1x1x1xf32>
      %49 = vector.extract %48[0, 0, 0] : f32 from vector<1x1x1xf32>
      %c0_28 = arith.constant 0 : index
      %c0_29 = arith.constant 0 : index
      %50 = vector.load %arg12[%c0_28, %c0_29] : memref<1x1xf32, #tpu.memory_space<vmem>>, vector<1x1xf32>
      %51 = vector.broadcast %49 : f32 to vector<1x1xf32>
      %52 = arith.addf %50, %51 : vector<1x1xf32>
      %c0_30 = arith.constant 0 : index
      %c0_31 = arith.constant 0 : index
      %53 = vector.load %arg12[%c0_30, %c0_31] : memref<1x1xf32, #tpu.memory_space<vmem>>, vector<1x1xf32>
      tpu.vector_store %arg12[%c0_30, %c0_31], %52 {strides = array<i32>} : memref<1x1xf32, #tpu.memory_space<vmem>>, vector<1x1xf32>,
    } else {
    }
    %c1_i32 = arith.constant 1 : i32
    %8 = arith.cmpi eq, %arg0, %c1_i32 : i32
    %9 = arith.extui %8 : i1 to i32
    %c0_i32_4 = arith.constant 0 : i32
    %10 = arith.cmpi ne, %9, %c0_i32_4 : i32
    scf.if %10 {
      %11 = arith.index_cast %arg1 : i32 to index
      %c0 = arith.constant 0 : index
      %c0_5 = arith.constant 0 : index
      %12 = vector.load %arg11[%11, %c0, %c0_5] : memref<1x2x8xf32, #tpu.memory_space<vmem>>, vector<1x2x8xf32>
      %13 = vector.shape_cast %12 : vector<1x2x8xf32> to vector<2x8xf32>
      %14 = vector.extract_strided_slice %13 {offsets = [0, 0], sizes = [2, 4], strides = [1, 1]} : vector<2x8xf32> to vector<2x4xf32>
      %15 = vector.extract_strided_slice %13 {offsets = [0, 4], sizes = [2, 1], strides = [1, 1]} : vector<2x8xf32> to vector<2x1xf32>
      %c0_6 = arith.constant 0 : index
      %c0_7 = arith.constant 0 : index
      %16 = vector.load %arg12[%c0_6, %c0_7] : memref<1x1xf32, #tpu.memory_space<vmem>>, vector<1x1xf32>
      %cst = arith.constant 1.250000e-01 : f32
      %17 = vector.broadcast %cst : f32 to vector<1x1xf32>
      %18 = arith.mulf %16, %17 : vector<1x1xf32>
      %19 = vector.broadcast %15 : vector<2x1xf32> to vector<2x4xf32>
      %20 = arith.addf %14, %19 : vector<2x4xf32>
      %21 = vector.broadcast %18 : vector<1x1xf32> to vector<2x4xf32>
      %22 = arith.subf %20, %21 : vector<2x4xf32>
      %c0_8 = arith.constant 0 : index
      %c0_9 = arith.constant 0 : index
      %23 = vector.load %arg10[%c0_8, %c0_9] : memref<2x4xf32, #tpu.memory_space<vmem>>, vector<2x4xf32>
      tpu.vector_store %arg10[%c0_8, %c0_9], %22 {strides = array<i32>} : memref<2x4xf32, #tpu.memory_space<vmem>>, vector<2x4xf32>,
    } else {
    }
    return
  }
  func.func @transform_0(%arg0: i32, %arg1: i32) -> (i32, i32) {
    %c1_i32 = arith.constant 1 : i32
    %0 = arith.subi %c1_i32, %arg0 : i32
    %1 = arith.muli %arg1, %0 : i32
    %c0_i32 = arith.constant 0 : i32
    %c0_i32_0 = arith.constant 0 : i32
    return %1, %c0_i32 : i32, i32
  }
  func.func @transform_1(%arg0: i32, %arg1: i32) -> (i32, i32) {
    %c0_i32 = arith.constant 0 : i32
    %c0_i32_0 = arith.constant 0 : i32
    %c0_i32_1 = arith.constant 0 : i32
    return %c0_i32, %c0_i32_0 : i32, i32
  }
  func.func @transform_2(%arg0: i32, %arg1: i32) -> (i32, i32) {
    %c0_i32 = arith.constant 0 : i32
    %c0_i32_0 = arith.constant 0 : i32
    %c0_i32_1 = arith.constant 0 : i32
    return %c0_i32, %c0_i32_0 : i32, i32
  }
  func.func @transform_3(%arg0: i32, %arg1: i32) -> (i32, i32) {
    %c0_i32 = arith.constant 0 : i32
    %c0_i32_0 = arith.constant 0 : i32
    %c0_i32_1 = arith.constant 0 : i32
    return %c0_i32, %c0_i32_0 : i32, i32
  }
  func.func @transform_4(%arg0: i32, %arg1: i32) -> (i32, i32) {
    %c0_i32 = arith.constant 0 : i32
    %c0_i32_0 = arith.constant 0 : i32
    %c0_i32_1 = arith.constant 0 : i32
    return %c0_i32, %c0_i32_0 : i32, i32
  }
  func.func @transform_5(%arg0: i32, %arg1: i32) -> (i32, i32) {
    %c0_i32 = arith.constant 0 : i32
    %c0_i32_0 = arith.constant 0 : i32
    %c0_i32_1 = arith.constant 0 : i32
    return %c0_i32, %c0_i32_0 : i32, i32
  }
  func.func @transform_6(%arg0: i32, %arg1: i32) -> (i32, i32) {
    %c0_i32 = arith.constant 0 : i32
    %c0_i32_0 = arith.constant 0 : i32
    %c0_i32_1 = arith.constant 0 : i32
    return %c0_i32, %c0_i32_0 : i32, i32
  }
  func.func @transform_7(%arg0: i32, %arg1: i32) -> (i32, i32) {
    %c0_i32 = arith.constant 0 : i32
    %c0_i32_0 = arith.constant 0 : i32
    %c0_i32_1 = arith.constant 0 : i32
    return %c0_i32, %c0_i32_0 : i32, i32
  }
  func.func @transform_8(%arg0: i32, %arg1: i32) -> (i32, i32) {
    %0 = arith.muli %arg1, %arg0 : i32
    %c0_i32 = arith.constant 0 : i32
    %c0_i32_0 = arith.constant 0 : i32
    return %0, %c0_i32 : i32, i32
  }
}

</mosaic_0001>

<llo_original>
// kernel: dueling_q_forward.1
$region0: #{dueling_q_forward.1}
  #allocation0 [shape = 'u32[]', space=smem, size = 0x4, offset = 0x4, fixed_abs, tag = 'smem constant byte address 0x4 - core index']
  #allocation1 [shape = 'u32[144,128]{1,0:T(1,128)}', space=vmem, size = 0x12000, scoped, tag = 'internal scratch']
  #allocation2 [shape = 'f32[1,2,8]{2,1,0:T(2,128)}', space=vmem, size = 0x400, scoped, tag = 'scratch operand']
  #allocation3 [shape = 'f32[1,1]{1,0:T(1,128)}', space=vmem, size = 0x200, scoped, tag = 'scratch operand']
  %s0 = inlined_call_operand.vmem [shape: f32[2,37], index: 0, kind: input, shape index: {}]
  %s1 = inlined_call_operand.vmem [shape: f32[37,512], index: 1, kind: input, shape index: {}]
  %s2 = inlined_call_operand.hbm [shape: f32[1,512], index: 2, kind: input, shape index: {}]
  %s3 = inlined_call_operand.hbm [shape: f32[1,512], index: 3, kind: input, shape index: {}]
  %s4 = inlined_call_operand.hbm [shape: f32[512,128], index: 4, kind: input, shape index: {}]
  %s5 = inlined_call_operand.hbm [shape: f32[1,128], index: 5, kind: input, shape index: {}]
  %s6 = inlined_call_operand.vmem [shape: f32[128,8], index: 6, kind: input, shape index: {}]
  %s7 = inlined_call_operand.hbm [shape: f32[1,8], index: 7, kind: input, shape index: {}]
  %s8 = inlined_call_operand.hbm [shape: f32[2,4], index: 8, kind: output, shape index: {}]
  %s9 = sld [smem:[#allocation0]]
  $region97: #{dueling_q_forward.1} parent=0
    _
  %s11 = ssub.s32 1, %s9
  %s12 = scalar_select 0, %s11, %s9
  $region1: #{dueling_q_forward.1} parent=0
    #allocation4 [shape = 'u8[2048]{0}', space=vmem, size = 0x800, scoped, tag = 'input window, operand 2, single buffered']
    #allocation5 [shape = 's32[2]{0}', space=sflag, size = 0x8, scoped, tag = 'scoped memory for dueling_q_forward.1']
    #allocation6 [shape = 's32[2]{0}', space=sflag, size = 0x8, scoped, tag = 'scoped memory for dueling_q_forward.1']
    #allocation7 [shape = 'u8[2048]{0}', space=vmem, size = 0x800, scoped, tag = 'input window, operand 3, single buffered']
    #allocation8 [shape = 's32[1]{0}', space=sflag, size = 0x4, scoped, tag = 'scoped memory for dueling_q_forward.1']
    #allocation9 [shape = 'u8[262144]{0}', space=vmem, size = 0x40000, scoped, tag = 'input window, operand 4, single buffered']
    #allocation10 [shape = 'u8[512]{0}', space=vmem, size = 0x400, scoped, tag = 'input window, operand 5, single buffered']
    #allocation11 [shape = 's32[1]{0}', space=sflag, size = 0x4, scoped, tag = 'scoped memory for dueling_q_forward.1']
    #allocation12 [shape = 'u8[512]{0}', space=vmem, size = 0x400, scoped, tag = 'input window, operand 7, single buffered']
    #allocation13 [shape = 'u8[2048]{0}', space=vmem, size = 0x800, scoped, tag = 'output window, operand 0']
    %13 = vsyncpa [#allocation5], 0
    %14 = vsyncpa [#allocation8], 0
    %15 = vsyncpa [#allocation11], 0
    %16 = vsyncpa [#allocation6], 0
    %s17 = scalar_lea.sflag [#allocation6], 1
    %18 = vsyncpa %s17, 0
    loop: start=0, step=1, limit=4
    $region2: #{dueling_q_forward.1} parent=1 // loop_pre_header
      _
    $region3: #{dueling_q_forward.1} parent=1 // loop_header
      %s20 = sphi 0, %s24
      %p21 = scmp.ge.s32.totalorder %s20, 4
      %s27 = sphi 0, %s39
      %s28 = sphi 0, %s35
      %s29 = sphi 0, %s27
      %s30 = sphi 0, %s28
      %s31 = sphi 0, %s29
      %s32 = sphi 0, %s30
      %s46 = sphi 0, %s48
      %s49 = sphi 0, %s46
      %s50 = sphi 0, %s49
      %s66 = sphi 0, %s50
      %s70 = sphi 0, %s70
      %s72 = sphi 0, %s70
      %s73 = sphi 0, %s72
      %s87 = sphi 0, %s73
      %s91 = sphi 0, %s91
      %s93 = sphi 0, %s91
      %s94 = sphi 0, %s93
      %s108 = sphi 0, %s94
      %s112 = sphi 0, %s112
      %s114 = sphi 0, %s112
      %s115 = sphi 0, %s114
      %s129 = sphi 0, %s115
      %s133 = sphi 0, %s133
      %s135 = sphi 0, %s133
      %s136 = sphi 0, %s135
      %s150 = sphi 0, %s136
      %s154 = sphi 0, %s154
      %s156 = sphi 0, %s154
      %s157 = sphi 0, %s156
      %s171 = sphi 0, %s157
      %s175 = sphi 0, %s175
      %s177 = sphi 0, %s175
      %s178 = sphi 0, %s177
      %s192 = sphi 0, %s178
      %s196 = sphi 0, %s196
      %s198 = sphi 0, %s196
      %s199 = sphi 0, %s198
      %s213 = sphi 0, %s199
      %s221 = sphi 0, %s223
      %s224 = sphi 0, %s221
      %s225 = sphi 0, %s224
      %s241 = sphi 0, %s225
    $region4: #{dueling_q_forward.1} parent=1 // loop_header_branch
      %23 = sbr.rel (%p21) target = $region8
    $region5: #{dueling_q_forward.1} parent=1 // loop_body
      %s25 = ssub.s32 %s20, 1
      %s26 = ssub.s32 %s20, 2
      %s33 = sadd.s32 1, %s28
      %p34 = scmp.ge.s32.totalorder %s33, 1
      %s35 = scalar_select %p34, 0, %s33
      %s36 = sadd.s32 1, %s27
      %s37 = scalar_select %p34, %s36, %s27
      %p38 = scmp.ge.s32.totalorder %s37, 2
      %s39 = scalar_select %p38, 0, %s37
      %s40 = ssub.s32 1, %s27
      %s41 = smul.u32 %s28, %s40
      %s42 = ssub.s32 1, %s39
      %s43 = smul.u32 %s35, %s42
      %s44 = ssub.s32 %s41, %s43
      %p45 = scmp.eq.s32.totalorder %s44, 0
      %s47 = sadd.s32 %s46, 1
      %s48 = scalar_select %p45, %s46, %s47
      %p51 = pneg %p45
      %p52 = scmp.eq.s32.totalorder %s20, 1
      %p53 = por %p51, %p52
      %p54 = scmp.ne.s32.totalorder %s46, %s49
      %p55 = scmp.eq.s32.totalorder %s20, 0
      %p56 = por %p54, %p55
      %p57 = scmp.ne.s32.totalorder %s46, %s49
      %p58 = scmp.eq.s32.totalorder %s25, 1
      %p59 = por %p57, %p58
      %p60 = scmp.ne.s32.totalorder %s49, %s50
      %p61 = scmp.eq.s32.totalorder %s25, 0
      %p62 = por %p60, %p61
      %p63 = scmp.ne.s32.totalorder %s49, %s50
      %p64 = scmp.eq.s32.totalorder %s26, 1
      %p65 = por %p63, %p64
      %p67 = scmp.ne.s32.totalorder %s50, %s66
      %p68 = scmp.eq.s32.totalorder %s26, 0
      %p69 = por %p67, %p68
      %s71 = sadd.s32 %s70, 1
      %p74 = scmp.eq.s32.totalorder %s20, 1
      %p75 = scmp.ne.s32.totalorder %s70, %s72
      %p76 = scmp.eq.s32.totalorder %s20, 0
      %p77 = por %p75, %p76
      %p78 = scmp.ne.s32.totalorder %s70, %s72
      %p79 = scmp.eq.s32.totalorder %s25, 1
      %p80 = por %p78, %p79
      %p81 = scmp.ne.s32.totalorder %s72, %s73
      %p82 = scmp.eq.s32.totalorder %s25, 0
      %p83 = por %p81, %p82
      %p84 = scmp.ne.s32.totalorder %s72, %s73
      %p85 = scmp.eq.s32.totalorder %s26, 1
      %p86 = por %p84, %p85
      %p88 = scmp.ne.s32.totalorder %s73, %s87
      %p89 = scmp.eq.s32.totalorder %s26, 0
      %p90 = por %p88, %p89
      %s92 = sadd.s32 %s91, 1
      %p95 = scmp.eq.s32.totalorder %s20, 1
      %p96 = scmp.ne.s32.totalorder %s91, %s93
      %p97 = scmp.eq.s32.totalorder %s20, 0
      %p98 = por %p96, %p97
      %p99 = scmp.ne.s32.totalorder %s91, %s93
      %p100 = scmp.eq.s32.totalorder %s25, 1
      %p101 = por %p99, %p100
      %p102 = scmp.ne.s32.totalorder %s93, %s94
      %p103 = scmp.eq.s32.totalorder %s25, 0
      %p104 = por %p102, %p103
      %p105 = scmp.ne.s32.totalorder %s93, %s94
      %p106 = scmp.eq.s32.totalorder %s26, 1
      %p107 = por %p105, %p106
      %p109 = scmp.ne.s32.totalorder %s94, %s108
      %p110 = scmp.eq.s32.totalorder %s26, 0
      %p111 = por %p109, %p110
      %s113 = sadd.s32 %s112, 1
      %p116 = scmp.eq.s32.totalorder %s20, 1
      %p117 = scmp.ne.s32.totalorder %s112, %s114
      %p118 = scmp.eq.s32.totalorder %s20, 0
      %p119 = por %p117, %p118
      %p120 = scmp.ne.s32.totalorder %s112, %s114
      %p121 = scmp.eq.s32.totalorder %s25, 1
      %p122 = por %p120, %p121
      %p123 = scmp.ne.s32.totalorder %s114, %s115
      %p124 = scmp.eq.s32.totalorder %s25, 0
      %p125 = por %p123, %p124
      %p126 = scmp.ne.s32.totalorder %s114, %s115
      %p127 = scmp.eq.s32.totalorder %s26, 1
      %p128 = por %p126, %p127
      %p130 = scmp.ne.s32.totalorder %s115, %s129
      %p131 = scmp.eq.s32.totalorder %s26, 0
      %p132 = por %p130, %p131
      %s134 = sadd.s32 %s133, 1
      %p137 = scmp.eq.s32.totalorder %s20, 1
      %p138 = scmp.ne.s32.totalorder %s133, %s135
      %p139 = scmp.eq.s32.totalorder %s20, 0
      %p140 = por %p138, %p139
      %p141 = scmp.ne.s32.totalorder %s133, %s135
      %p142 = scmp.eq.s32.totalorder %s25, 1
      %p143 = por %p141, %p142
      %p144 = scmp.ne.s32.totalorder %s135, %s136
      %p145 = scmp.eq.s32.totalorder %s25, 0
      %p146 = por %p144, %p145
      %p147 = scmp.ne.s32.totalorder %s135, %s136
      %p148 = scmp.eq.s32.totalorder %s26, 1
      %p149 = por %p147, %p148
      %p151 = scmp.ne.s32.totalorder %s136, %s150
      %p152 = scmp.eq.s32.totalorder %s26, 0
      %p153 = por %p151, %p152
      %s155 = sadd.s32 %s154, 1
      %p158 = scmp.eq.s32.totalorder %s20, 1
      %p159 = scmp.ne.s32.totalorder %s154, %s156
      %p160 = scmp.eq.s32.totalorder %s20, 0
      %p161 = por %p159, %p160
      %p162 = scmp.ne.s32.totalorder %s154, %s156
      %p163 = scmp.eq.s32.totalorder %s25, 1
      %p164 = por %p162, %p163
      %p165 = scmp.ne.s32.totalorder %s156, %s157
      %p166 = scmp.eq.s32.totalorder %s25, 0
      %p167 = por %p165, %p166
      %p168 = scmp.ne.s32.totalorder %s156, %s157
      %p169 = scmp.eq.s32.totalorder %s26, 1
      %p170 = por %p168, %p169
      %p172 = scmp.ne.s32.totalorder %s157, %s171
      %p173 = scmp.eq.s32.totalorder %s26, 0
      %p174 = por %p172, %p173
      %s176 = sadd.s32 %s175, 1
      %p179 = scmp.eq.s32.totalorder %s20, 1
      %p180 = scmp.ne.s32.totalorder %s175, %s177
      %p181 = scmp.eq.s32.totalorder %s20, 0
      %p182 = por %p180, %p181
      %p183 = scmp.ne.s32.totalorder %s175, %s177
      %p184 = scmp.eq.s32.totalorder %s25, 1
      %p185 = por %p183, %p184
      %p186 = scmp.ne.s32.totalorder %s177, %s178
      %p187 = scmp.eq.s32.totalorder %s25, 0
      %p188 = por %p186, %p187
      %p189 = scmp.ne.s32.totalorder %s177, %s178
      %p190 = scmp.eq.s32.totalorder %s26, 1
      %p191 = por %p189, %p190
      %p193 = scmp.ne.s32.totalorder %s178, %s192
      %p194 = scmp.eq.s32.totalorder %s26, 0
      %p195 = por %p193, %p194
      %s197 = sadd.s32 %s196, 1
      %p200 = scmp.eq.s32.totalorder %s20, 1
      %p201 = scmp.ne.s32.totalorder %s196, %s198
      %p202 = scmp.eq.s32.totalorder %s20, 0
      %p203 = por %p201, %p202
      %p204 = scmp.ne.s32.totalorder %s196, %s198
      %p205 = scmp.eq.s32.totalorder %s25, 1
      %p206 = por %p204, %p205
      %p207 = scmp.ne.s32.totalorder %s198, %s199
      %p208 = scmp.eq.s32.totalorder %s25, 0
      %p209 = por %p207, %p208
      %p210 = scmp.ne.s32.totalorder %s198, %s199
      %p211 = scmp.eq.s32.totalorder %s26, 1
      %p212 = por %p210, %p211
      %p214 = scmp.ne.s32.totalorder %s199, %s213
      %p215 = scmp.eq.s32.totalorder %s26, 0
      %p216 = por %p214, %p215
      %s217 = smul.u32 %s28, %s27
      %s218 = smul.u32 %s35, %s39
      %s219 = ssub.s32 %s217, %s218
      %p220 = scmp.eq.s32.totalorder %s219, 0
      %s222 = sadd.s32 %s221, 1
      %s223 = scalar_select %p220, %s221, %s222
      %p226 = pneg %p220
      %p227 = scmp.eq.s32.totalorder %s20, 1
      %p228 = por %p226, %p227
      %p229 = scmp.ne.s32.totalorder %s221, %s224
      %p230 = scmp.eq.s32.totalorder %s20, 0
      %p231 = por %p229, %p230
      %p232 = scmp.ne.s32.totalorder %s221, %s224
      %p233 = scmp.eq.s32.totalorder %s25, 1
      %p234 = por %p232, %p233
      %p235 = scmp.ne.s32.totalorder %s224, %s225
      %p236 = scmp.eq.s32.totalorder %s25, 0
      %p237 = por %p235, %p236
      %p238 = scmp.ne.s32.totalorder %s224, %s225
      %p239 = scmp.eq.s32.totalorder %s26, 1
      %p240 = por %p238, %p239
      %p242 = scmp.ne.s32.totalorder %s225, %s241
      %p243 = scmp.eq.s32.totalorder %s26, 0
      %p244 = por %p242, %p243
      %p245 = scmp.le.s32.totalorder 1, %s20
      %p246 = scmp.lt.s32.totalorder %s20, 3
      %p247 = pnand %p245, %p246
      %p248 = pneg %p247
      // Predicated region
      $region9: #{dueling_q_forward.1} parent=5 // pred_check
        _
      $region10: #{dueling_q_forward.1} parent=5 // pred_check_branch
        %250 = sbr.rel (%p247) target = $region12
      $region11: #{dueling_q_forward.1} parent=5 // pred_region
        %s251 = ssub.s32 %s20, 1
        // Predicated region
        $region13: #{dueling_q_forward.1} parent=11 // pred_check
          %p252 = pneg %p83
        $region14: #{dueling_q_forward.1} parent=11 // pred_check_branch
          %254 = sbr.rel (%p252) target = $region16
        $region15: #{dueling_q_forward.1} parent=11 // pred_region
          _
        $region16: #{dueling_q_forward.1} parent=11 // pred_fallthru
          _
        // Predicated region
        $region17: #{dueling_q_forward.1} parent=11 // pred_check
          %p255 = pneg %p104
        $region18: #{dueling_q_forward.1} parent=11 // pred_check_branch
          %257 = sbr.rel (%p255) target = $region20
        $region19: #{dueling_q_forward.1} parent=11 // pred_region
          %s259 = ssub.s32 64, 64
          %260 = vsyncadd [#allocation5], %s259
          %s262 = sshll.u32 [#allocation4], 4
          %s263 = int_to_ptr.vmem [resolvable:$true] %s262
          %265 = dma.hbm_to_vmem [thread:$0]  %s2, 64, %s263, [#allocation5]
        $region20: #{dueling_q_forward.1} parent=11 // pred_fallthru
          _
        // Predicated region
        $region21: #{dueling_q_forward.1} parent=11 // pred_check
          %p266 = pneg %p125
        $region22: #{dueling_q_forward.1} parent=11 // pred_check_branch
          %268 = sbr.rel (%p266) target = $region24
        $region23: #{dueling_q_forward.1} parent=11 // pred_region
          %s270 = ssub.s32 64, 64
          %271 = vsyncadd [#allocation8], %s270
          %s273 = sshll.u32 [#allocation7], 4
          %s274 = int_to_ptr.vmem [resolvable:$true] %s273
          %276 = dma.hbm_to_vmem [thread:$0]  %s3, 64, %s274, [#allocation8]
        $region24: #{dueling_q_forward.1} parent=11 // pred_fallthru
          _
        // Predicated region
        $region25: #{dueling_q_forward.1} parent=11 // pred_check
          %p277 = pneg %p146
        $region26: #{dueling_q_forward.1} parent=11 // pred_check_branch
          %279 = sbr.rel (%p277) target = $region28
        $region27: #{dueling_q_forward.1} parent=11 // pred_region
          %s281 = ssub.s32 8192, 8192
          %282 = vsyncadd [#allocation8], %s281
          %s283 = sshll.u32 [#allocation9], 4
          %s284 = int_to_ptr.vmem [resolvable:$true] %s283
          %289 = dma.hbm_to_vmem [thread:$0]  %s4, 8192, %s284, [#allocation8], 128, 128, 8
        $region28: #{dueling_q_forward.1} parent=11 // pred_fallthru
          _
        // Predicated region
        $region29: #{dueling_q_forward.1} parent=11 // pred_check
          %p290 = pneg %p167
        $region30: #{dueling_q_forward.1} parent=11 // pred_check_branch
          %292 = sbr.rel (%p290) target = $region32
        $region31: #{dueling_q_forward.1} parent=11 // pred_region
          %s294 = ssub.s32 16, 16
          %295 = vsyncadd [#allocation11], %s294
          %s297 = sshll.u32 [#allocation10], 4
          %s298 = int_to_ptr.vmem [resolvable:$true] %s297
          %300 = dma.hbm_to_vmem [thread:$0]  %s5, 16, %s298, [#allocation11]
        $region32: #{dueling_q_forward.1} parent=11 // pred_fallthru
          _
        // Predicated region
        $region33: #{dueling_q_forward.1} parent=11 // pred_check
          %p301 = pneg %p188
        $region34: #{dueling_q_forward.1} parent=11 // pred_check_branch
          %303 = sbr.rel (%p301) target = $region36
        $region35: #{dueling_q_forward.1} parent=11 // pred_region
          _
        $region36: #{dueling_q_forward.1} parent=11 // pred_fallthru
          _
        // Predicated region
        $region37: #{dueling_q_forward.1} parent=11 // pred_check
          %p304 = pneg %p209
        $region38: #{dueling_q_forward.1} parent=11 // pred_check_branch
          %306 = sbr.rel (%p304) target = $region40
        $region39: #{dueling_q_forward.1} parent=11 // pred_region
          %s308 = ssub.s32 16, 16
          %309 = vsyncadd [#allocation11], %s308
          %s311 = sshll.u32 [#allocation12], 4
          %s312 = int_to_ptr.vmem [resolvable:$true] %s311
          %314 = dma.hbm_to_vmem [thread:$0]  %s7, 16, %s312, [#allocation11]
        $region40: #{dueling_q_forward.1} parent=11 // pred_fallthru
          _
      $region12: #{dueling_q_forward.1} parent=5 // pred_fallthru
        _
      %p315 = scmp.lt.s32.totalorder %s20, 2
      // Predicated region
      $region41: #{dueling_q_forward.1} parent=5 // pred_check
        %p316 = pneg %p315
      $region42: #{dueling_q_forward.1} parent=5 // pred_check_branch
        %318 = sbr.rel (%p316) target = $region44
      $region43: #{dueling_q_forward.1} parent=5 // pred_region
        // Predicated region
        $region45: #{dueling_q_forward.1} parent=43 // pred_check
          %p319 = pneg %p56
        $region46: #{dueling_q_forward.1} parent=43 // pred_check_branch
          %321 = sbr.rel (%p319) target = $region48
        $region47: #{dueling_q_forward.1} parent=43 // pred_region
          %s322 = ssub.s32 1, %s27
          %s323 = smul.u32 %s28, %s322
          %p324 = scmp.lt.s32.totalorder %s323, 0
          %s325 = scalar_select %p324, %s323, 0
          %s326 = smul.addr %s325, 2
          %s327 = scalar_lea.vmem %s0, %s326
          %s328 = ssub.s32 1, %s27
          %s329 = smul.u32 %s28, %s328
        $region48: #{dueling_q_forward.1} parent=43 // pred_fallthru
          _
      $region44: #{dueling_q_forward.1} parent=5 // pred_fallthru
        _
      %p330 = scmp.le.s32.totalorder 1, %s20
      %p331 = scmp.lt.s32.totalorder %s20, 3
      %p332 = pnand %p330, %p331
      %p333 = pneg %p332
      // Predicated region
      $region49: #{dueling_q_forward.1} parent=5 // pred_check
        _
      $region50: #{dueling_q_forward.1} parent=5 // pred_check_branch
        %335 = sbr.rel (%p332) target = $region52
      $region51: #{dueling_q_forward.1} parent=5 // pred_region
        %s336 = ssub.s32 %s20, 1
        // Predicated region
        $region53: #{dueling_q_forward.1} parent=51 // pred_check
          %p337 = pneg %p104
        $region54: #{dueling_q_forward.1} parent=51 // pred_check_branch
          %339 = sbr.rel (%p337) target = $region56
        $region55: #{dueling_q_forward.1} parent=51 // pred_region
          %340 = dma.done [#allocation5], 64
        $region56: #{dueling_q_forward.1} parent=51 // pred_fallthru
          _
        // Predicated region
        $region57: #{dueling_q_forward.1} parent=51 // pred_check
          %p341 = pneg %p125
        $region58: #{dueling_q_forward.1} parent=51 // pred_check_branch
          %343 = sbr.rel (%p341) target = $region60
        $region59: #{dueling_q_forward.1} parent=51 // pred_region
          %344 = dma.done [#allocation8], 64
        $region60: #{dueling_q_forward.1} parent=51 // pred_fallthru
          _
        // Predicated region
        $region61: #{dueling_q_forward.1} parent=51 // pred_check
          %p345 = pneg %p146
        $region62: #{dueling_q_forward.1} parent=51 // pred_check_branch
          %347 = sbr.rel (%p345) target = $region64
        $region63: #{dueling_q_forward.1} parent=51 // pred_region
          %348 = dma.done [#allocation8], 8192
        $region64: #{dueling_q_forward.1} parent=51 // pred_fallthru
          _
        // Predicated region
        $region65: #{dueling_q_forward.1} parent=51 // pred_check
          %p349 = pneg %p167
        $region66: #{dueling_q_forward.1} parent=51 // pred_check_branch
          %351 = sbr.rel (%p349) target = $region68
        $region67: #{dueling_q_forward.1} parent=51 // pred_region
          %352 = dma.done [#allocation11], 16
        $region68: #{dueling_q_forward.1} parent=51 // pred_fallthru
          _
        // Predicated region
        $region69: #{dueling_q_forward.1} parent=51 // pred_check
          %p353 = pneg %p209
        $region70: #{dueling_q_forward.1} parent=51 // pred_check_branch
          %355 = sbr.rel (%p353) target = $region72
        $region71: #{dueling_q_forward.1} parent=51 // pred_region
          %356 = dma.done [#allocation11], 16
        $region72: #{dueling_q_forward.1} parent=51 // pred_fallthru
          _
        %s357 = ssub.s32 1, %s29
        %s358 = smul.u32 %s30, %s357
        %p359 = scmp.lt.s32.totalorder %s358, 0
        %s360 = scalar_select %p359, %s358, 0
        %s361 = smul.addr %s360, 2
        %s362 = scalar_lea.vmem %s0, %s361
        %p363 = pneg %p62
        %p364 = pneg %p59
        %p365 = pneg %p83
        %p366 = pneg %p80
        %p367 = pneg %p104
        %p368 = pneg %p101
        %p369 = pneg %p125
        %p370 = pneg %p122
        %p371 = pneg %p146
        %p372 = pneg %p143
        %p373 = pneg %p167
        %p374 = pneg %p164
        %p375 = pneg %p188
        %p376 = pneg %p185
        %p377 = pneg %p209
        %p378 = pneg %p206
        %p379 = pneg %p237
        %p380 = pneg %p234
        %s381 = sand.u32 %s224, 1
        %s382 = scalar_lea.sflag [#allocation6], %s381
        %s383 = sand.u32 %s224, 1
        %s384 = smul.addr %s383, 2
        %s385 = scalar_lea.vmem [#allocation13], %s384
        %s386 = ssub.s32 1, %s29
        %s387 = smul.u32 %s30, %s386
        %p388 = scmp.lt.s32.totalorder %s387, 0
        %s389 = scalar_select %p388, %s387, 0
        %s390 = smul.addr %s389, 2
        %s391 = scalar_lea.vmem %s0, %s390
        %s392 = ssub.s32 1, %s29
        %s393 = smul.u32 %s30, %s392
        %s394 = smul.u32 %s30, %s29
        %p395 = scmp.eq.s32.totalorder %s29, 0
        %p396 = scmp.eq.s32.totalorder %s30, 0
        %p397 = pnand %p395, %p396
        %p398 = pneg %p397
        // Predicated region
        $region73: #{dueling_q_forward.1} parent=51 // pred_check
          _
        $region74: #{dueling_q_forward.1} parent=51 // pred_check_branch
          %400 = sbr.rel (%p397) target = $region76
        $region75: #{dueling_q_forward.1} parent=51 // pred_region
          %vm401 = vcmask 0
          %402 = vst.msk [vmem:[#allocation3] sm:$0x1] %vm401, 0.0
        $region76: #{dueling_q_forward.1} parent=51 // pred_fallthru
          _
        // Predicated region
        $region77: #{dueling_q_forward.1} parent=51 // pred_check
          %p403 = pneg %p395
        $region78: #{dueling_q_forward.1} parent=51 // pred_check_branch
          %405 = sbr.rel (%p403) target = $region80
        $region79: #{dueling_q_forward.1} parent=51 // pred_region
          %v406 = vld [vmem:[%s391] sm:$0x3]
          %v407 = vld [vmem:[%s1] sm:$0xff]
          %v408 = vld [vmem:[%s1 + $0x8] sm:$0xff]
          %v409 = vld [vmem:[%s1 + $0x10] sm:$0xff]
          %v410 = vld [vmem:[%s1 + $0x18] sm:$0xff]
          %v411 = vld [vmem:[%s1 + $0x20] sm:$0xff]
          %v412 = vld [vmem:[%s1 + $0x28] sm:$0xff]
          %v413 = vld [vmem:[%s1 + $0x30] sm:$0xff]
          %v414 = vld [vmem:[%s1 + $0x38] sm:$0xff]
          %v415 = vld [vmem:[%s1 + $0x40] sm:$0xff]
          %v416 = vld [vmem:[%s1 + $0x48] sm:$0xff]
          %v417 = vld [vmem:[%s1 + $0x50] sm:$0xff]
          %v418 = vld [vmem:[%s1 + $0x58] sm:$0xff]
          %v419 = vld [vmem:[%s1 + $0x60] sm:$0xff]
          %v420 = vld [vmem:[%s1 + $0x68] sm:$0xff]
          %v421 = vld [vmem:[%s1 + $0x70] sm:$0xff]
          %v422 = vld [vmem:[%s1 + $0x78] sm:$0xff]
          %v423 = vld [vmem:[%s1 + $0x80] sm:$0x1f]
          %v424 = vld [vmem:[%s1 + $0x88] sm:$0x1f]
          %v425 = vld [vmem:[%s1 + $0x90] sm:$0x1f]
          %v426 = vld [vmem:[%s1 + $0x98] sm:$0x1f]
          %v427 = vld [vmem:[#allocation4] sm:$0xf]
          %v429 = vlaneseq
          %v430 = vshrl.u32 %v429, 7
          %v431 = vsub.s32 0, %v430
          %v432 = vrot.slane %v427, %v431
          %v433 = vlaneseq
          %v434 = vshrl.u32 %v433, 7
          %v435 = vsub.s32 1, %v434
          %v436 = vrot.slane %v427, %v435
          %v437 = vlaneseq
          %v438 = vshrl.u32 %v437, 7
          %v439 = vsub.s32 2, %v438
          %v440 = vrot.slane %v427, %v439
          %v441 = vlaneseq
          %v442 = vshrl.u32 %v441, 7
          %v443 = vsub.s32 3, %v442
          %v444 = vrot.slane %v427, %v443
          %vm449 = vcmask 302080
          %v451 = vsel %vm449, %v406, 0
          %vm453 = vcmask 1044480
          %v455 = vsel %vm453, %v423, 0
          %v458 = vsel %vm453, %v424, 0
          %v461 = vsel %vm453, %v425, 0
          %v464 = vsel %vm453, %v426, 0
          %466 = vmatprep.subr.mxu0 %v408
          %467 = vmatpush1.msra.mxu0 %v407
          %468 = vmatprep.subr.mxu0 %v412
          %469 = vmatpush1.msra.mxu0 %v411
          %470 = vmatprep.subr.mxu0 %v416
          %471 = vmatpush1.msra.mxu0 %v415
          %472 = vmatprep.subr.mxu0 %v420
          %473 = vmatpush1.msra.mxu0 %v419
          %474 = vmatprep.subr.mxu0 %v458
          %475 = vmatpush1.msra.mxu0 %v455
          %476 = vmatprep.subr.mxu0 0.0
          %477 = vmatpush1.msra.mxu0 0.0
          %478 = vmatprep.subr.mxu0 0.0
          %479 = vmatpush1.msra.mxu0 0.0
          %480 = vmatprep.subr.mxu0 0.0
          %481 = vmatpush1.msra.mxu0 0.0
          %482 = vmatprep.subr.mxu0 0.0
          %483 = vmatpush1.msra.mxu0 0.0
          %484 = vmatprep.subr.mxu0 0.0
          %485 = vmatpush1.msra.mxu0 0.0
          %486 = vmatprep.subr.mxu0 0.0
          %487 = vmatpush1.msra.mxu0 0.0
          %488 = vmatprep.subr.mxu0 0.0
          %489 = vmatpush1.msra.mxu0 0.0
          %490 = vmatprep.subr.mxu0 0.0
          %491 = vmatpush1.msra.mxu0 0.0
          %492 = vmatprep.subr.mxu0 0.0
          %493 = vmatpush1.msra.mxu0 0.0
          %494 = vmatprep.subr.mxu0 0.0
          %495 = vmatpush1.msra.mxu0 0.0
          %496 = vmatprep.subr.mxu0 0.0
          %497 = vmatpush1.msra.mxu0 0.0
          %498 = vmatprep.subr.mxu0 0.0
          %499 = vmatpush1.msra.mxu0 0.0
          %500 = vmatprep.subr.mxu0 0.0
          %501 = vmatpush1.msra.mxu0 0.0
          %502 = vmatprep.subr.mxu0 0.0
          %503 = vmatpush1.msra.mxu0 0.0
          %504 = vmatprep.subr.mxu0 0.0
          %505 = vmatpush1.msra.mxu0 0.0
          %506 = vmatprep.subr.mxu0 0.0
          %507 = vmatpush1.msra.mxu0 0.0
          %508 = vmatprep.subr.mxu0 0.0
          %509 = vmatpush1.msra.mxu0 0.0
          %510 = vmatprep.subr.mxu0 0.0
          %511 = vmatpush1.msra.mxu0 0.0
          %512 = vmatprep.subr.mxu0 0.0
          %513 = vmatpush1.msra.mxu0 0.0
          %514 = vmatprep.subr.mxu0 0.0
          %515 = vmatpush1.msra.mxu0 0.0
          %516 = vmatprep.subr.mxu0 0.0
          %517 = vmatpush1.msra.mxu0 0.0
          %518 = vmatprep.subr.mxu0 0.0
          %519 = vmatpush1.msra.mxu0 0.0
          %520 = vmatprep.subr.mxu0 0.0
          %521 = vmatpush1.msra.mxu0 0.0
          %522 = vmatprep.subr.mxu0 0.0
          %523 = vmatpush1.msra.mxu0 0.0
          %524 = vmatprep.subr.mxu0 0.0
          %525 = vmatpush1.msra.mxu0 0.0
          %526 = vmatprep.subr.mxu0 0.0
          %527 = vmatpush1.msra.mxu0 0.0
          %528 = vmatprep.subr.mxu0 0.0
          %529 = vmatpush1.msra.mxu0 0.0
          %530 = vmatprep.mubr.f32.mxu0 0.0
          %531 = vmatmul.mubr.f32.gmra.mrb[0].mxu0 %v451
          %v532 = vpop.f32.mrb[0].mxu0
          %v533 = vadd.f32 %v432, %v532
          %v534 = vpop.f32.mrb[0].mxu0
          %v535 = vadd.f32 %v436, %v534
          %536 = vdwg.mxu0
          %537 = vmatprep.subr.mxu0 %v410
          %538 = vmatpush1.msra.mxu0 %v409
          %539 = vmatprep.subr.mxu0 %v414
          %540 = vmatpush1.msra.mxu0 %v413
          %541 = vmatprep.subr.mxu0 %v418
          %542 = vmatpush1.msra.mxu0 %v417
          %543 = vmatprep.subr.mxu0 %v422
          %544 = vmatpush1.msra.mxu0 %v421
          %545 = vmatprep.subr.mxu0 %v464
          %546 = vmatpush1.msra.mxu0 %v461
          %547 = vmatprep.subr.mxu0 0.0
          %548 = vmatpush1.msra.mxu0 0.0
          %549 = vmatprep.subr.mxu0 0.0
          %550 = vmatpush1.msra.mxu0 0.0
          %551 = vmatprep.subr.mxu0 0.0
          %552 = vmatpush1.msra.mxu0 0.0
          %553 = vmatprep.subr.mxu0 0.0
          %554 = vmatpush1.msra.mxu0 0.0
          %555 = vmatprep.subr.mxu0 0.0
          %556 = vmatpush1.msra.mxu0 0.0
          %557 = vmatprep.subr.mxu0 0.0
          %558 = vmatpush1.msra.mxu0 0.0
          %559 = vmatprep.subr.mxu0 0.0
          %560 = vmatpush1.msra.mxu0 0.0
          %561 = vmatprep.subr.mxu0 0.0
          %562 = vmatpush1.msra.mxu0 0.0
          %563 = vmatprep.subr.mxu0 0.0
          %564 = vmatpush1.msra.mxu0 0.0
          %565 = vmatprep.subr.mxu0 0.0
          %566 = vmatpush1.msra.mxu0 0.0
          %567 = vmatprep.subr.mxu0 0.0
          %568 = vmatpush1.msra.mxu0 0.0
          %569 = vmatprep.subr.mxu0 0.0
          %570 = vmatpush1.msra.mxu0 0.0
          %571 = vmatprep.subr.mxu0 0.0
          %572 = vmatpush1.msra.mxu0 0.0
          %573 = vmatprep.subr.mxu0 0.0
          %574 = vmatpush1.msra.mxu0 0.0
          %575 = vmatprep.subr.mxu0 0.0
          %576 = vmatpush1.msra.mxu0 0.0
          %577 = vmatprep.subr.mxu0 0.0
          %578 = vmatpush1.msra.mxu0 0.0
          %579 = vmatprep.subr.mxu0 0.0
          %580 = vmatpush1.msra.mxu0 0.0
          %581 = vmatprep.subr.mxu0 0.0
          %582 = vmatpush1.msra.mxu0 0.0
          %583 = vmatprep.subr.mxu0 0.0
          %584 = vmatpush1.msra.mxu0 0.0
          %585 = vmatprep.subr.mxu0 0.0
          %586 = vmatpush1.msra.mxu0 0.0
          %587 = vmatprep.subr.mxu0 0.0
          %588 = vmatpush1.msra.mxu0 0.0
          %589 = vmatprep.subr.mxu0 0.0
          %590 = vmatpush1.msra.mxu0 0.0
          %591 = vmatprep.subr.mxu0 0.0
          %592 = vmatpush1.msra.mxu0 0.0
          %593 = vmatprep.subr.mxu0 0.0
          %594 = vmatpush1.msra.mxu0 0.0
          %595 = vmatprep.subr.mxu0 0.0
          %596 = vmatpush1.msra.mxu0 0.0
          %597 = vmatprep.subr.mxu0 0.0
          %598 = vmatpush1.msra.mxu0 0.0
          %599 = vmatprep.subr.mxu0 0.0
          %600 = vmatpush1.msra.mxu0 0.0
          %601 = vmatprep.mubr.f32.mxu0 0.0
          %602 = vmatmul.mubr.f32.gmra.mrb[0].mxu0 %v451
          %v603 = vpop.f32.mrb[0].mxu0
          %v604 = vadd.f32 %v440, %v603
          %v605 = vpop.f32.mrb[0].mxu0
          %v606 = vadd.f32 %v444, %v605
          %607 = vdwg.mxu0
          %v608 = vld [vmem:[#allocation7] sm:$0xf]
          %v610 = vlaneseq
          %v611 = vshrl.u32 %v610, 7
          %v612 = vsub.s32 0, %v611
          %v613 = vrot.slane %v608, %v612
          %v614 = vlaneseq
          %v615 = vshrl.u32 %v614, 7
          %v616 = vsub.s32 1, %v615
          %v617 = vrot.slane %v608, %v616
          %v618 = vlaneseq
          %v619 = vshrl.u32 %v618, 7
          %v620 = vsub.s32 2, %v619
          %v621 = vrot.slane %v608, %v620
          %v622 = vlaneseq
          %v623 = vshrl.u32 %v622, 7
          %v624 = vsub.s32 3, %v623
          %v625 = vrot.slane %v608, %v624
          %v630 = vmul.f32 %v533, %v613
          %v631 = vmul.f32 %v535, %v617
          %v632 = vmul.f32 %v604, %v621
          %v633 = vmul.f32 %v606, %v625
          %v634 = vmax.f32 %v533, %v630
          %v635 = vmax.f32 %v535, %v631
          %v636 = vmax.f32 %v604, %v632
          %v637 = vmax.f32 %v606, %v633
          %v638 = vld [vmem:[#allocation9] sm:$0xff]
          %v639 = vld [vmem:[#allocation9 + $0x8] sm:$0xff]
          %v640 = vld [vmem:[#allocation9 + $0x10] sm:$0xff]
          %v641 = vld [vmem:[#allocation9 + $0x18] sm:$0xff]
          %v642 = vld [vmem:[#allocation9 + $0x20] sm:$0xff]
          %v643 = vld [vmem:[#allocation9 + $0x28] sm:$0xff]
          %v644 = vld [vmem:[#allocation9 + $0x30] sm:$0xff]
          %v645 = vld [vmem:[#allocation9 + $0x38] sm:$0xff]
          %v646 = vld [vmem:[#allocation9 + $0x40] sm:$0xff]
          %v647 = vld [vmem:[#allocation9 + $0x48] sm:$0xff]
          %v648 = vld [vmem:[#allocation9 + $0x50] sm:$0xff]
          %v649 = vld [vmem:[#allocation9 + $0x58] sm:$0xff]
          %v650 = vld [vmem:[#allocation9 + $0x60] sm:$0xff]
          %v651 = vld [vmem:[#allocation9 + $0x68] sm:$0xff]
          %v652 = vld [vmem:[#allocation9 + $0x70] sm:$0xff]
          %v653 = vld [vmem:[#allocation9 + $0x78] sm:$0xff]
          %v654 = vld [vmem:[#allocation9 + $0x80] sm:$0xff]
          %v655 = vld [vmem:[#allocation9 + $0x88] sm:$0xff]
          %v656 = vld [vmem:[#allocation9 + $0x90] sm:$0xff]
          %v657 = vld [vmem:[#allocation9 + $0x98] sm:$0xff]
          %v658 = vld [vmem:[#allocation9 + $0xa0] sm:$0xff]
          %v659 = vld [vmem:[#allocation9 + $0xa8] sm:$0xff]
          %v660 = vld [vmem:[#allocation9 + $0xb0] sm:$0xff]
          %v661 = vld [vmem:[#allocation9 + $0xb8] sm:$0xff]
          %v662 = vld [vmem:[#allocation9 + $0xc0] sm:$0xff]
          %v663 = vld [vmem:[#allocation9 + $0xc8] sm:$0xff]
          %v664 = vld [vmem:[#allocation9 + $0xd0] sm:$0xff]
          %v665 = vld [vmem:[#allocation9 + $0xd8] sm:$0xff]
          %v666 = vld [vmem:[#allocation9 + $0xe0] sm:$0xff]
          %v667 = vld [vmem:[#allocation9 + $0xe8] sm:$0xff]
          %v668 = vld [vmem:[#allocation9 + $0xf0] sm:$0xff]
          %v669 = vld [vmem:[#allocation9 + $0xf8] sm:$0xff]
          %v670 = vld [vmem:[#allocation9 + $0x100] sm:$0xff]
          %v671 = vld [vmem:[#allocation9 + $0x108] sm:$0xff]
          %v672 = vld [vmem:[#allocation9 + $0x110] sm:$0xff]
          %v673 = vld [vmem:[#allocation9 + $0x118] sm:$0xff]
          %v674 = vld [vmem:[#allocation9 + $0x120] sm:$0xff]
          %v675 = vld [vmem:[#allocation9 + $0x128] sm:$0xff]
          %v676 = vld [vmem:[#allocation9 + $0x130] sm:$0xff]
          %v677 = vld [vmem:[#allocation9 + $0x138] sm:$0xff]
          %v678 = vld [vmem:[#allocation9 + $0x140] sm:$0xff]
          %v679 = vld [vmem:[#allocation9 + $0x148] sm:$0xff]
          %v680 = vld [vmem:[#allocation9 + $0x150] sm:$0xff]
          %v681 = vld [vmem:[#allocation9 + $0x158] sm:$0xff]
          %v682 = vld [vmem:[#allocation9 + $0x160] sm:$0xff]
          %v683 = vld [vmem:[#allocation9 + $0x168] sm:$0xff]
          %v684 = vld [vmem:[#allocation9 + $0x170] sm:$0xff]
          %v685 = vld [vmem:[#allocation9 + $0x178] sm:$0xff]
          %v686 = vld [vmem:[#allocation9 + $0x180] sm:$0xff]
          %v687 = vld [vmem:[#allocation9 + $0x188] sm:$0xff]
          %v688 = vld [vmem:[#allocation9 + $0x190] sm:$0xff]
          %v689 = vld [vmem:[#allocation9 + $0x198] sm:$0xff]
          %v690 = vld [vmem:[#allocation9 + $0x1a0] sm:$0xff]
          %v691 = vld [vmem:[#allocation9 + $0x1a8] sm:$0xff]
          %v692 = vld [vmem:[#allocation9 + $0x1b0] sm:$0xff]
          %v693 = vld [vmem:[#allocation9 + $0x1b8] sm:$0xff]
          %v694 = vld [vmem:[#allocation9 + $0x1c0] sm:$0xff]
          %v695 = vld [vmem:[#allocation9 + $0x1c8] sm:$0xff]
          %v696 = vld [vmem:[#allocation9 + $0x1d0] sm:$0xff]
          %v697 = vld [vmem:[#allocation9 + $0x1d8] sm:$0xff]
          %v698 = vld [vmem:[#allocation9 + $0x1e0] sm:$0xff]
          %v699 = vld [vmem:[#allocation9 + $0x1e8] sm:$0xff]
          %v700 = vld [vmem:[#allocation9 + $0x1f0] sm:$0xff]
          %v701 = vld [vmem:[#allocation9 + $0x1f8] sm:$0xff]
          %v702 = vld [vmem:[#allocation10] sm:$0x1]
          %v704 = vlaneseq
          %v705 = vshrl.u32 %v704, 7
          %v706 = vsub.s32 0, %v705
          %v707 = vrot.slane %v702, %v706
          %709 = vmatprep.subr.mxu0 0.0
          %710 = vmatpush1.msra.mxu0 %v638
          %711 = vmatprep.subr.mxu0 0.0
          %712 = vmatpush1.msra.mxu0 %v639
          %713 = vmatprep.subr.mxu0 0.0
          %714 = vmatpush1.msra.mxu0 %v640
          %715 = vmatprep.subr.mxu0 0.0
          %716 = vmatpush1.msra.mxu0 %v641
          %717 = vmatprep.subr.mxu0 0.0
          %718 = vmatpush1.msra.mxu0 %v642
          %719 = vmatprep.subr.mxu0 0.0
          %720 = vmatpush1.msra.mxu0 %v643
          %721 = vmatprep.subr.mxu0 0.0
          %722 = vmatpush1.msra.mxu0 %v644
          %723 = vmatprep.subr.mxu0 0.0
          %724 = vmatpush1.msra.mxu0 %v645
          %725 = vmatprep.subr.mxu0 0.0
          %726 = vmatpush1.msra.mxu0 %v646
          %727 = vmatprep.subr.mxu0 0.0
          %728 = vmatpush1.msra.mxu0 %v647
          %729 = vmatprep.subr.mxu0 0.0
          %730 = vmatpush1.msra.mxu0 %v648
          %731 = vmatprep.subr.mxu0 0.0
          %732 = vmatpush1.msra.mxu0 %v649
          %733 = vmatprep.subr.mxu0 0.0
          %734 = vmatpush1.msra.mxu0 %v650
          %735 = vmatprep.subr.mxu0 0.0
          %736 = vmatpush1.msra.mxu0 %v651
          %737 = vmatprep.subr.mxu0 0.0
          %738 = vmatpush1.msra.mxu0 %v652
          %739 = vmatprep.subr.mxu0 0.0
          %740 = vmatpush1.msra.mxu0 %v653
          %741 = vmatprep.subr.mxu0 0.0
          %742 = vmatpush1.msra.mxu0 %v654
          %743 = vmatprep.subr.mxu0 0.0
          %744 = vmatpush1.msra.mxu0 %v655
          %745 = vmatprep.subr.mxu0 0.0
          %746 = vmatpush1.msra.mxu0 %v656
          %747 = vmatprep.subr.mxu0 0.0
          %748 = vmatpush1.msra.mxu0 %v657
          %749 = vmatprep.subr.mxu0 0.0
          %750 = vmatpush1.msra.mxu0 %v658
          %751 = vmatprep.subr.mxu0 0.0
          %752 = vmatpush1.msra.mxu0 %v659
          %753 = vmatprep.subr.mxu0 0.0
          %754 = vmatpush1.msra.mxu0 %v660
          %755 = vmatprep.subr.mxu0 0.0
          %756 = vmatpush1.msra.mxu0 %v661
          %757 = vmatprep.subr.mxu0 0.0
          %758 = vmatpush1.msra.mxu0 %v662
          %759 = vmatprep.subr.mxu0 0.0
          %760 = vmatpush1.msra.mxu0 %v663
          %761 = vmatprep.subr.mxu0 0.0
          %762 = vmatpush1.msra.mxu0 %v664
          %763 = vmatprep.subr.mxu0 0.0
          %764 = vmatpush1.msra.mxu0 %v665
          %765 = vmatprep.subr.mxu0 0.0
          %766 = vmatpush1.msra.mxu0 %v666
          %767 = vmatprep.subr.mxu0 0.0
          %768 = vmatpush1.msra.mxu0 %v667
          %769 = vmatprep.subr.mxu0 0.0
          %770 = vmatpush1.msra.mxu0 %v668
          %771 = vmatprep.subr.mxu0 0.0
          %772 = vmatpush1.msra.mxu0 %v669
          %773 = vmatprep.mubr.f32.mxu0 %v635
          %774 = vmatmul.mubr.f32.gmra.mrb[0].mxu0 %v634
          %v775 = vpop.f32.mrb[0].mxu0
          %v776 = vadd.f32 %v707, %v775
          %v777 = vpop.f32.mrb[0].mxu0
          %778 = vdwg.mxu0
          %779 = vmatprep.subr.mxu0 0.0
          %780 = vmatpush1.msra.mxu0 %v670
          %781 = vmatprep.subr.mxu0 0.0
          %782 = vmatpush1.msra.mxu0 %v671
          %783 = vmatprep.subr.mxu0 0.0
          %784 = vmatpush1.msra.mxu0 %v672
          %785 = vmatprep.subr.mxu0 0.0
          %786 = vmatpush1.msra.mxu0 %v673
          %787 = vmatprep.subr.mxu0 0.0
          %788 = vmatpush1.msra.mxu0 %v674
          %789 = vmatprep.subr.mxu0 0.0
          %790 = vmatpush1.msra.mxu0 %v675
          %791 = vmatprep.subr.mxu0 0.0
          %792 = vmatpush1.msra.mxu0 %v676
          %793 = vmatprep.subr.mxu0 0.0
          %794 = vmatpush1.msra.mxu0 %v677
          %795 = vmatprep.subr.mxu0 0.0
          %796 = vmatpush1.msra.mxu0 %v678
          %797 = vmatprep.subr.mxu0 0.0
          %798 = vmatpush1.msra.mxu0 %v679
          %799 = vmatprep.subr.mxu0 0.0
          %800 = vmatpush1.msra.mxu0 %v680
          %801 = vmatprep.subr.mxu0 0.0
          %802 = vmatpush1.msra.mxu0 %v681
          %803 = vmatprep.subr.mxu0 0.0
          %804 = vmatpush1.msra.mxu0 %v682
          %805 = vmatprep.subr.mxu0 0.0
          %806 = vmatpush1.msra.mxu0 %v683
          %807 = vmatprep.subr.mxu0 0.0
          %808 = vmatpush1.msra.mxu0 %v684
          %809 = vmatprep.subr.mxu0 0.0
          %810 = vmatpush1.msra.mxu0 %v685
          %811 = vmatprep.subr.mxu0 0.0
          %812 = vmatpush1.msra.mxu0 %v686
          %813 = vmatprep.subr.mxu0 0.0
          %814 = vmatpush1.msra.mxu0 %v687
          %815 = vmatprep.subr.mxu0 0.0
          %816 = vmatpush1.msra.mxu0 %v688
          %817 = vmatprep.subr.mxu0 0.0
          %818 = vmatpush1.msra.mxu0 %v689
          %819 = vmatprep.subr.mxu0 0.0
          %820 = vmatpush1.msra.mxu0 %v690
          %821 = vmatprep.subr.mxu0 0.0
          %822 = vmatpush1.msra.mxu0 %v691
          %823 = vmatprep.subr.mxu0 0.0
          %824 = vmatpush1.msra.mxu0 %v692
          %825 = vmatprep.subr.mxu0 0.0
          %826 = vmatpush1.msra.mxu0 %v693
          %827 = vmatprep.subr.mxu0 0.0
          %828 = vmatpush1.msra.mxu0 %v694
          %829 = vmatprep.subr.mxu0 0.0
          %830 = vmatpush1.msra.mxu0 %v695
          %831 = vmatprep.subr.mxu0 0.0
          %832 = vmatpush1.msra.mxu0 %v696
          %833 = vmatprep.subr.mxu0 0.0
          %834 = vmatpush1.msra.mxu0 %v697
          %835 = vmatprep.subr.mxu0 0.0
          %836 = vmatpush1.msra.mxu0 %v698
          %837 = vmatprep.subr.mxu0 0.0
          %838 = vmatpush1.msra.mxu0 %v699
          %839 = vmatprep.subr.mxu0 0.0
          %840 = vmatpush1.msra.mxu0 %v700
          %841 = vmatprep.subr.mxu0 0.0
          %842 = vmatpush1.msra.mxu0 %v701
          %843 = vmatprep.mubr.f32.mxu0 %v637
          %844 = vmatmul.mubr.f32.gmra.mrb[0].mxu0 %v636
          %v845 = vpop.f32.mrb[0].mxu0
          %v846 = vadd.f32 %v776, %v845
          %v847 = vpop.f32.mrb[0].mxu0
          %848 = vdwg.mxu0
          %v849 = vmax.f32 %v846, 0.0
          %v850 = vld [vmem:[%s6] sm:$0xff]
          %v851 = vld [vmem:[%s6 + $0x8] sm:$0xff]
          %v852 = vld [vmem:[%s6 + $0x10] sm:$0xff]
          %v853 = vld [vmem:[%s6 + $0x18] sm:$0xff]
          %v854 = vld [vmem:[%s6 + $0x20] sm:$0xff]
          %v855 = vld [vmem:[%s6 + $0x28] sm:$0xff]
          %v856 = vld [vmem:[%s6 + $0x30] sm:$0xff]
          %v857 = vld [vmem:[%s6 + $0x38] sm:$0xff]
          %v858 = vld [vmem:[%s6 + $0x40] sm:$0xff]
          %v859 = vld [vmem:[%s6 + $0x48] sm:$0xff]
          %v860 = vld [vmem:[%s6 + $0x50] sm:$0xff]
          %v861 = vld [vmem:[%s6 + $0x58] sm:$0xff]
          %v862 = vld [vmem:[%s6 + $0x60] sm:$0xff]
          %v863 = vld [vmem:[%s6 + $0x68] sm:$0xff]
          %v864 = vld [vmem:[%s6 + $0x70] sm:$0xff]
          %v865 = vld [vmem:[%s6 + $0x78] sm:$0xff]
          %v866 = vld [vmem:[#allocation12] sm:$0x1]
          %v868 = vlaneseq
          %v869 = vshrl.u32 %v868, 7
          %v870 = vsub.s32 0, %v869
          %v871 = vrot.slane %v866, %v870
          %873 = vmatprep.subr.mxu0 0.0
          %874 = vmatpush1.msra.mxu0 %v850
          %875 = vmatprep.subr.mxu0 0.0
          %876 = vmatpush1.msra.mxu0 %v851
          %877 = vmatprep.subr.mxu0 0.0
          %878 = vmatpush1.msra.mxu0 %v852
          %879 = vmatprep.subr.mxu0 0.0
          %880 = vmatpush1.msra.mxu0 %v853
          %881 = vmatprep.subr.mxu0 0.0
          %882 = vmatpush1.msra.mxu0 %v854
          %883 = vmatprep.subr.mxu0 0.0
          %884 = vmatpush1.msra.mxu0 %v855
          %885 = vmatprep.subr.mxu0 0.0
          %886 = vmatpush1.msra.mxu0 %v856
          %887 = vmatprep.subr.mxu0 0.0
          %888 = vmatpush1.msra.mxu0 %v857
          %889 = vmatprep.subr.mxu0 0.0
          %890 = vmatpush1.msra.mxu0 %v858
          %891 = vmatprep.subr.mxu0 0.0
          %892 = vmatpush1.msra.mxu0 %v859
          %893 = vmatprep.subr.mxu0 0.0
          %894 = vmatpush1.msra.mxu0 %v860
          %895 = vmatprep.subr.mxu0 0.0
          %896 = vmatpush1.msra.mxu0 %v861
          %897 = vmatprep.subr.mxu0 0.0
          %898 = vmatpush1.msra.mxu0 %v862
          %899 = vmatprep.subr.mxu0 0.0
          %900 = vmatpush1.msra.mxu0 %v863
          %901 = vmatprep.subr.mxu0 0.0
          %902 = vmatpush1.msra.mxu0 %v864
          %903 = vmatprep.subr.mxu0 0.0
          %904 = vmatpush1.msra.mxu0 %v865
          %905 = vmatprep.subr.mxu0 0.0
          %906 = vmatpush1.msra.mxu0 0.0
          %907 = vmatprep.subr.mxu0 0.0
          %908 = vmatpush1.msra.mxu0 0.0
          %909 = vmatprep.subr.mxu0 0.0
          %910 = vmatpush1.msra.mxu0 0.0
          %911 = vmatprep.subr.mxu0 0.0
          %912 = vmatpush1.msra.mxu0 0.0
          %913 = vmatprep.subr.mxu0 0.0
          %914 = vmatpush1.msra.mxu0 0.0
          %915 = vmatprep.subr.mxu0 0.0
          %916 = vmatpush1.msra.mxu0 0.0
          %917 = vmatprep.subr.mxu0 0.0
          %918 = vmatpush1.msra.mxu0 0.0
          %919 = vmatprep.subr.mxu0 0.0
          %920 = vmatpush1.msra.mxu0 0.0
          %921 = vmatprep.subr.mxu0 0.0
          %922 = vmatpush1.msra.mxu0 0.0
          %923 = vmatprep.subr.mxu0 0.0
          %924 = vmatpush1.msra.mxu0 0.0
          %925 = vmatprep.subr.mxu0 0.0
          %926 = vmatpush1.msra.mxu0 0.0
          %927 = vmatprep.subr.mxu0 0.0
          %928 = vmatpush1.msra.mxu0 0.0
          %929 = vmatprep.subr.mxu0 0.0
          %930 = vmatpush1.msra.mxu0 0.0
          %931 = vmatprep.subr.mxu0 0.0
          %932 = vmatpush1.msra.mxu0 0.0
          %933 = vmatprep.subr.mxu0 0.0
          %934 = vmatpush1.msra.mxu0 0.0
          %935 = vmatprep.subr.mxu0 0.0
          %936 = vmatpush1.msra.mxu0 0.0
          %937 = vmatprep.mubr.f32.mxu0 0.0
          %938 = vmatmul.mubr.f32.gmra.mrb[0].mxu0 %v849
          %v939 = vpop.f32.mrb[0].mxu0
          %v940 = vadd.f32 %v871, %v939
          %v941 = vpop.f32.mrb[0].mxu0
          %942 = vdwg.mxu0
          %s943 = smul.u32 %s30, 2
          %s944 = scalar_lea.vmem [#allocation2], %s943
          %vm945 = vcmask 58368
          %946 = vst.msk [vmem:[%s944] sm:$0x3] %vm945, %v940
          %v947 = vlaneseq
          %v948 = vshrl.u32 %v947, 7
          %v949 = vstv %s943
          %v950 = vadd.s32 %v949, %v948
          %vm951 = vcmp.lt.s32.totalorder %v950, 2
          %v952 = vsel %vm951, %v940, 0.0
          %vm953 = vcmask 25600
          %v954 = vsel %vm953, %v952, 0.0
          %955 = vadd.xlane.f32.xlu0 %v954
          %v956 = vpop.xlane.xlu0 %955
          %v957 = vrot.slane %v956, 4
          %v958 = vadd.f32 %v956, %v957
          %v959 = vrot.slane %v958, 2
          %v960 = vadd.f32 %v958, %v959
          %v961 = vrot.slane %v960, 1
          %v962 = vadd.f32 %v960, %v961
          %s963 = vtos %v962
          %v964 = vld [vmem:[#allocation3] sm:$0x1]
          %v965 = vstv %s963
          %v966 = vadd.f32 %v964, %v965
          %vm967 = vcmask 0
          %968 = vst.msk [vmem:[#allocation3] sm:$0x1] %vm967, %v966
        $region80: #{dueling_q_forward.1} parent=51 // pred_fallthru
          _
        %p969 = scmp.eq.s32.totalorder %s29, 1
        // Predicated region
        $region81: #{dueling_q_forward.1} parent=51 // pred_check
          %p970 = pneg %p969
        $region82: #{dueling_q_forward.1} parent=51 // pred_check_branch
          %972 = sbr.rel (%p970) target = $region84
        $region83: #{dueling_q_forward.1} parent=51 // pred_region
          %s973 = smul.u32 %s30, 2
          %s974 = scalar_lea.vmem [#allocation2], %s973
          %v975 = vld [vmem:[%s974] sm:$0x3]
          %v976 = vld [vmem:[#allocation3] sm:$0x1]
          %v977 = vmul.f32 %v976, 0.125
          %979 = vset.pattern.permute.xlu0 4
          %980 = vperm.xlu0 %979, %v975
          %v981 = vpop.permute.xlu0 %980
          %v983 = vadd.f32 %v975, %v981
          %v985 = vlaneseq
          %v986 = vshrl.u32 %v985, 7
          %v987 = vsub.s32 0, %v986
          %v988 = vrot.slane %v977, %v987
          %989 = vset.pattern.permute.xlu0 0
          %990 = vperm.xlu0 %989, %v988
          %v991 = vpop.permute.xlu0 %990
          %v993 = vsub.f32 %v983, %v991
          %vm994 = vcmask 25600
          %995 = vst.msk [vmem:[%s385] sm:$0x3] %vm994, %v993
        $region84: #{dueling_q_forward.1} parent=51 // pred_fallthru
          _
        %s996 = sand.u32 %s224, 1
        %s997 = scalar_lea.sflag [#allocation6], %s996
        %s998 = sand.u32 %s224, 1
        %s999 = smul.addr %s998, 2
        %s1000 = scalar_lea.vmem [#allocation13], %s999
        // Predicated region
        $region85: #{dueling_q_forward.1} parent=51 // pred_check
          %p1001 = pneg %p234
        $region86: #{dueling_q_forward.1} parent=51 // pred_check_branch
          %1003 = sbr.rel (%p1001) target = $region88
        $region87: #{dueling_q_forward.1} parent=51 // pred_region
          %s1004 = smul.u32 %s30, %s29
          %s1006 = ssub.s32 32, 32
          %1007 = vsyncadd %s997, %s1006
          %s1008 = smul.addr %s1004, 32
          %s1009 = scalar_lea.hbm %s8, %s1008
          %s1011 = sshll.u32 %s1000, 4
          %s1012 = int_to_ptr.vmem [resolvable:$true] %s1011
          %1014 = dma.vmem_to_hbm [thread:$0]  %s1012, 32, %s1009, %s997
        $region88: #{dueling_q_forward.1} parent=51 // pred_fallthru
          _
      $region52: #{dueling_q_forward.1} parent=5 // pred_fallthru
        _
      %p1015 = scmp.le.s32.totalorder 2, %s20
      // Predicated region
      $region89: #{dueling_q_forward.1} parent=5 // pred_check
        %p1016 = pneg %p1015
      $region90: #{dueling_q_forward.1} parent=5 // pred_check_branch
        %1018 = sbr.rel (%p1016) target = $region92
      $region91: #{dueling_q_forward.1} parent=5 // pred_region
        %s1019 = ssub.s32 %s20, 2
        // Predicated region
        $region93: #{dueling_q_forward.1} parent=91 // pred_check
          %p1020 = pneg %p240
        $region94: #{dueling_q_forward.1} parent=91 // pred_check_branch
          %1022 = sbr.rel (%p1020) target = $region96
        $region95: #{dueling_q_forward.1} parent=91 // pred_region
          %s1023 = sand.u32 %s225, 1
          %s1024 = scalar_lea.sflag [#allocation6], %s1023
          %s1025 = sand.u32 %s225, 1
          %s1026 = smul.addr %s1025, 2
          %s1027 = scalar_lea.vmem [#allocation13], %s1026
          %1028 = dma.done %s1024, 32
        $region96: #{dueling_q_forward.1} parent=91 // pred_fallthru
          _
      $region92: #{dueling_q_forward.1} parent=5 // pred_fallthru
        _
    $region6: #{dueling_q_forward.1} parent=1 // loop_footer
      %s24 = sadd.s32 1, %s20
    $region7: #{dueling_q_forward.1} parent=1 // loop_footer_branch
      %19 = sbr.rel target = $region3
    $region8: #{dueling_q_forward.1} parent=1 // loop_exit
      _
    %1029 = vsyncpa [#allocation5], 1
    %s1030 = scalar_lea.sflag [#allocation5], 1
    %1031 = vsyncpa %s1030, 1
    %1032 = vsyncpa [#allocation8], 1
    %1033 = vsyncpa [#allocation11], 1
    %1034 = vsyncpa [#allocation6], 1
    %s1035 = scalar_lea.sflag [#allocation6], 1
    %1036 = vsyncpa %s1035, 1

</llo_original>
